<compile_context>
chip_gen: v5e
topology: v5e:2x2
jax: 0.10.0
libtpu: 0.0.40
codegen_flags: <defaults>
</compile_context>

<pallas_src>
import functools

import jax
import jax.numpy as jnp
from jax.experimental import pallas as pl
from jax.experimental.pallas import tpu as pltpu


def _round_up(a: int, b: int) -> int:
    return (a + b - 1) // b * b


def _pad_axis(a, target: int, axis: int):
    pad = target - a.shape[axis]
    if pad == 0:
        return a
    widths = [(0, 0)] * a.ndim
    widths[axis] = (0, pad)
    return jnp.pad(a, widths)


def _vmem_capacity_bytes() -> int:
    """Physical VMEM of this generation; conservative 64 MiB if undetectable."""
    try:
        return int(pltpu.get_tpu_info().vmem_capacity_bytes)
    except Exception:
        return 64 * 1024 * 1024


def _default_vmem_limit() -> int:
    cap = _vmem_capacity_bytes()
    # 128 MiB parts (v5e/v6e) -> ~100 MiB scoped limit; 64 MiB (v7x) -> ~48 MiB.
    return int(max(32 * 1024 * 1024, min(cap - 16 * 1024 * 1024, 100 * 1024 * 1024)))


def _pick_th(dim: int, hidden: int, w_itemsize: int, x_itemsize: int,
             tm_hint: int = 512, vmem_budget: int | None = None) -> int:
    """Largest lane-aligned hidden tile whose double-buffered working set fits VMEM."""
    if vmem_budget is None:
        vmem_budget = _default_vmem_limit()
    fixed = 2 * tm_hint * dim * x_itemsize      # x blocks (double-buffered)
    fixed += 2 * tm_hint * dim * x_itemsize     # out blocks
    fixed += tm_hint * dim * 4                  # f32 accumulator scratch
    avail = vmem_budget - fixed - (4 << 20)     # headroom
    per_th = 6 * dim * w_itemsize               # 2*(dim,2*th) + 2*(th,dim) buffers
    th = avail // per_th if avail > 0 else 128
    th = int(max(128, min(1024, (th // 128) * 128)))
    th = min(th, _round_up(hidden, 128))
    return th


def prepare_ffn_weights(w1, w3, w2, *, th: int | None = None, x_dtype=None):
    """One-time (model-load) weight prep.  w1/w3: [dim, hidden], w2: [hidden, dim].

    Returns (w13_tiles, w2_tiles):
      w13_tiles: (nh, dim, 2*th)  -- per hidden tile, contiguous [w1_h | w3_h]
      w2_tiles : (nh, th, dim)
    Hidden is zero-padded to a multiple of th (exact: zero columns/rows add 0).
    """
    dim, hidden = w1.shape
    assert w3.shape == (dim, hidden) and w2.shape == (hidden, dim)
    w_itemsize = jnp.dtype(w1.dtype).itemsize
    x_itemsize = jnp.dtype(x_dtype).itemsize if x_dtype is not None else w_itemsize

    if th is None:
        th = _pick_th(dim, hidden, w_itemsize, x_itemsize)
    th = max(128, _round_up(int(th), 128))          # lane-aligned hidden tile
    th = min(th, _round_up(hidden, 128))
    hidden_pad = _round_up(hidden, th)
    nh = hidden_pad // th

    w1p = _pad_axis(w1, hidden_pad, 1).reshape(dim, nh, th)
    w3p = _pad_axis(w3, hidden_pad, 1).reshape(dim, nh, th)
    w13 = jnp.transpose(jnp.concatenate([w1p, w3p], axis=-1), (1, 0, 2))  # (nh, dim, 2*th)
    w2t = _pad_axis(w2, hidden_pad, 0).reshape(nh, th, dim)               # (nh, th, dim)
    return w13, w2t


def _ffn_kernel(x_ref, w13_ref, w2_ref, o_ref, acc_ref, *, th: int):
    """One (token-tile, hidden-tile) grid step.

    x_ref   : (tm, dim)        token row tile
    w13_ref : (dim, 2*th)      contiguous [w1_h | w3_h] slab (leading dim squeezed)
    w2_ref  : (th, dim)        down-projection rows for this hidden tile
    o_ref   : (tm, dim)        output tile (written on last hidden step)
    acc_ref : (tm, dim) f32    VMEM accumulator across hidden tiles
    """
    h = pl.program_id(1)

    @pl.when(h == 0)
    def _():
        acc_ref[...] = jnp.zeros_like(acc_ref)

    x = x_ref[...]                                                       # (tm, dim)
    # Single fused up-projection: one wide MXU matmul instead of two.
    h13 = jnp.dot(x, w13_ref[...], preferred_element_type=jnp.float32)   # (tm, 2*th)
    h1 = h13[:, :th]                                                     # lane-aligned slices
    h3 = h13[:, th:]
    gated = (h1 * jax.nn.sigmoid(h1)) * h3                               # SiLU gate, f32

    # Partial down-projection for this hidden tile; accumulate in f32.
    acc_ref[...] += jnp.dot(gated.astype(w2_ref.dtype), w2_ref[...],
                            preferred_element_type=jnp.float32)

    @pl.when(h == pl.num_programs(1) - 1)
    def _():
        o_ref[...] = acc_ref[...].astype(o_ref.dtype)


def feed_forward_pallas(x, w13_tiles, w2_tiles, *, tm: int = 512,
                        vmem_limit_bytes: int | None = None):
    """SwiGLU FFN forward.  x: [B, S, dim]; weights pre-tiled by prepare_ffn_weights.

    tm : token row tile (512 default for prefill; clamped to the problem, kept a
         multiple of 16 for bf16 sublane packing).  The token axis is NOT padded:
         the ragged last tile runs with masked output writeback.
    """
    B, S, dim = x.shape
    nh, dim_w, two_th = w13_tiles.shape
    th = two_th // 2
    assert dim_w == dim, "weight dim mismatch with x"
    assert w2_tiles.shape == (nh, th, dim)

    M = B * S
    tm = int(max(16, min(_round_up(int(tm), 16), _round_up(M, 16))))
    n_row_tiles = pl.cdiv(M, tm)

    if vmem_limit_bytes is None:
        vmem_limit_bytes = _default_vmem_limit()

    x2d = x.reshape(M, dim)

    x_sz = jnp.dtype(x.dtype).itemsize
    w_sz = jnp.dtype(w13_tiles.dtype).itemsize
    cost = pl.CostEstimate(
        flops=6 * M * dim * nh * th,                       # 2 up-proj + 1 down-proj
        transcendentals=M * nh * th,                       # sigmoid
        bytes_accessed=int(2 * M * dim * x_sz              # x in + out
                           + n_row_tiles * nh * 3 * th * dim * w_sz),  # weights per row tile
    )

    out2d = pl.pallas_call(
        functools.partial(_ffn_kernel, th=th),
        out_shape=jax.ShapeDtypeStruct((M, dim), x.dtype),
        grid_spec=pltpu.PrefetchScalarGridSpec(
            num_scalar_prefetch=0,
            grid=(n_row_tiles, nh),
            in_specs=[
                pl.BlockSpec((tm, dim), lambda i, h: (i, 0)),            # x row tile
                pl.BlockSpec((None, dim, 2 * th), lambda i, h: (h, 0, 0)),  # [w1_h | w3_h] slab
                pl.BlockSpec((None, th, dim), lambda i, h: (h, 0, 0)),      # w2 slab
            ],
            out_specs=pl.BlockSpec((tm, dim), lambda i, h: (i, 0)),
            scratch_shapes=[pltpu.VMEM((tm, dim), jnp.float32)],         # f32 accumulator
        ),
        compiler_params=pltpu.CompilerParams(
            dimension_semantics=("parallel", "arbitrary"),               # tokens || , hidden = reduction
            vmem_limit_bytes=int(vmem_limit_bytes),
        ),
        cost_estimate=cost,
    )(x2d, w13_tiles, w2_tiles)

    return out2d.reshape(B, S, dim)


def make_hidden_dim(dim, hidden_dim, multiple_of=64, ffn_dim_multiplier=None):
    hidden_dim = int(2 * hidden_dim / 3)
    if ffn_dim_multiplier is not None:
        hidden_dim = int(ffn_dim_multiplier * hidden_dim)
    hidden_dim = multiple_of * ((hidden_dim + multiple_of - 1) // multiple_of)
    return hidden_dim


def _ref_ffn(x, w1, w3, w2):
    h1 = x @ w1
    h3 = x @ w3
    return (h1 * jax.nn.sigmoid(h1) * h3) @ w2


if __name__ == "__main__":
    # Small shapes consistent with the module's forward: x [B, S, dim].
    dim = 128
    hidden = make_hidden_dim(dim, 4 * dim, multiple_of=64)   # int(2*512/3)=341 -> 384

    key = jax.random.PRNGKey(0)
    kx, kx2, k1, k2, k3 = jax.random.split(key, 5)

    # Weights already transposed relative to nn.Linear: w1/w3 [dim, hidden], w2 [hidden, dim].
    w1 = jax.random.normal(k1, (dim, hidden), dtype=jnp.float32) * 0.02
    w3 = jax.random.normal(k3, (dim, hidden), dtype=jnp.float32) * 0.02
    w2 = jax.random.normal(k2, (hidden, dim), dtype=jnp.float32) * 0.02

    # ---- Test A: explicit small hidden tile -> exercises the hidden reduction
    #      axis (nh=3) with the f32 accumulator.  Weight prep hoisted (done once).
    x_a = jax.random.normal(kx, (2, 8, dim), dtype=jnp.float32)
    ref_a = _ref_ffn(x_a, w1, w3, w2)
    w13_128, w2_128 = prepare_ffn_weights(w1, w3, w2, th=128)
    y_a = jax.block_until_ready(feed_forward_pallas(x_a, w13_128, w2_128, tm=16))
    assert jnp.allclose(y_a, ref_a, atol=1e-4, rtol=1e-4), "mismatch (test A) vs reference"

    # ---- Test B: token axis with multiple row tiles AND a ragged last tile
    #      (M=39, tm=16 -> grid (3, 3), last tile has 7 valid rows, masked writeback).
    x_b = jax.random.normal(kx2, (3, 13, dim), dtype=jnp.float32)
    ref_b = _ref_ffn(x_b, w1, w3, w2)
    y_b = jax.block_until_ready(feed_forward_pallas(x_b, w13_128, w2_128, tm=16))
    assert jnp.allclose(y_b, ref_b, atol=1e-4, rtol=1e-4), "mismatch (test B, ragged tiles)"

    # ---- Test C: fully auto tiles (th derived from VMEM capacity, default tm clamped).
    w13_auto, w2_auto = prepare_ffn_weights(w1, w3, w2)
    y_c = jax.block_until_ready(feed_forward_pallas(x_a, w13_auto, w2_auto))
    assert jnp.allclose(y_c, ref_a, atol=1e-4, rtol=1e-4), "mismatch (test C, auto tiles)"

    # ---- Test D: bf16 fast path (production dtype): bf16 operands, f32 MXU accumulation.
    xb = x_a.astype(jnp.bfloat16)
    w1b, w3b, w2b = (a.astype(jnp.bfloat16) for a in (w1, w3, w2))
    w13_b, w2_b = prepare_ffn_weights(w1b, w3b, w2b, x_dtype=jnp.bfloat16)
    yb = jax.block_until_ready(feed_forward_pallas(xb, w13_b, w2_b))
    ybf = yb.astype(jnp.float32)
    # bf16-weight, f32-accumulate reference (same numerics as the kernel path).
    h1b = jnp.dot(xb, w1b, preferred_element_type=jnp.float32)
    h3b = jnp.dot(xb, w3b, preferred_element_type=jnp.float32)
    gb = (h1b * jax.nn.sigmoid(h1b)) * h3b
    ref_bf = jnp.dot(gb.astype(jnp.bfloat16), w2b, preferred_element_type=jnp.float32)
    assert bool(jnp.all(jnp.isfinite(ybf))), "bf16 path produced non-finite values"
    assert jnp.allclose(ybf, ref_bf, atol=2e-2, rtol=5e-2), "bf16 path deviates from bf16 reference"

    print("KERNEL_OK")
</pallas_src>

<mosaic_0001>
module attributes {stable_mosaic.version = 11 : i64} {
  func.func @_ffn_kernel(%arg0: i32, %arg1: i32, %arg2: memref<16x128xf32, #tpu.memory_space<vmem>>, %arg3: memref<1x128x256xf32, #tpu.memory_space<vmem>>, %arg4: memref<1x128x128xf32, #tpu.memory_space<vmem>>, %arg5: memref<16x128xf32, #tpu.memory_space<vmem>>, %arg6: memref<16x128xf32, #tpu.memory_space<vmem>>) attributes {dimension_semantics = [#tpu.dimension_semantics<parallel>, #tpu.dimension_semantics<arbitrary>], iteration_bounds = array<i64: 1, 3>, scalar_prefetch = 0 : i64, scratch_operands = 1 : i64, tpu.core_type = #tpu.core_type<tc>, window_params = [{transform_indices = @transform_0, window_bounds = array<i64: 16, 128>}, {transform_indices = @transform_1, window_bounds = array<i64: 1, 128, 256>}, {transform_indices = @transform_2, window_bounds = array<i64: 1, 128, 128>}, {transform_indices = @transform_3, window_bounds = array<i64: 16, 128>}]} {
    %c0_i32 = arith.constant 0 : i32
    %0 = arith.cmpi eq, %arg1, %c0_i32 : i32
    %1 = arith.extui %0 : i1 to i32
    %c0_i32_0 = arith.constant 0 : i32
    %2 = arith.cmpi ne, %1, %c0_i32_0 : i32
    scf.if %2 {
      %cst_15 = arith.constant 0.000000e+00 : f32
      %25 = vector.broadcast %cst_15 : f32 to vector<16x128xf32>
      %c0_16 = arith.constant 0 : index
      %c0_17 = arith.constant 0 : index
      %26 = vector.load %arg6[%c0_16, %c0_17] : memref<16x128xf32, #tpu.memory_space<vmem>>, vector<16x128xf32>
      tpu.vector_store %arg6[%c0_16, %c0_17], %25 {strides = array<i32>} : memref<16x128xf32, #tpu.memory_space<vmem>>, vector<16x128xf32>,
    } else {
    }
    %c0 = arith.constant 0 : index
    %c0_1 = arith.constant 0 : index
    %3 = vector.load %arg2[%c0, %c0_1] : memref<16x128xf32, #tpu.memory_space<vmem>>, vector<16x128xf32>
    %c0_2 = arith.constant 0 : index
    %c0_3 = arith.constant 0 : index
    %c0_4 = arith.constant 0 : index
    %4 = vector.load %arg3[%c0_2, %c0_3, %c0_4] : memref<1x128x256xf32, #tpu.memory_space<vmem>>, vector<1x128x256xf32>
    %5 = vector.shape_cast %4 : vector<1x128x256xf32> to vector<128x256xf32>
    %cst = arith.constant dense<0.000000e+00> : vector<16x256xf32>
    %6 = tpu.matmul %3, %5, %cst {dimension_numbers = #tpu.dot_dimension_numbers<[1], [0], [0], [1], [0, 0, 1, 1], [], []>} : vector<16x128xf32>, vector<128x256xf32>, vector<16x256xf32> -> vector<16x256xf32>
    %7 = vector.extract_strided_slice %6 {offsets = [0, 0], sizes = [16, 128], strides = [1, 1]} : vector<16x256xf32> to vector<16x128xf32>
    %8 = vector.extract_strided_slice %6 {offsets = [0, 128], sizes = [16, 128], strides = [1, 1]} : vector<16x256xf32> to vector<16x128xf32>
    %9 = arith.negf %7 : vector<16x128xf32>
    %10 = math.exp %9 : vector<16x128xf32>
    %cst_5 = arith.constant 1.000000e+00 : f32
    %11 = vector.broadcast %cst_5 : f32 to vector<16x128xf32>
    %12 = arith.addf %11, %10 : vector<16x128xf32>
    %13 = arith.divf %11, %12 : vector<16x128xf32>
    %14 = arith.mulf %7, %13 : vector<16x128xf32>
    %15 = arith.mulf %14, %8 : vector<16x128xf32>
    %c0_6 = arith.constant 0 : index
    %c0_7 = arith.constant 0 : index
    %16 = vector.load %arg6[%c0_6, %c0_7] : memref<16x128xf32, #tpu.memory_space<vmem>>, vector<16x128xf32>
    %c0_8 = arith.constant 0 : index
    %c0_9 = arith.constant 0 : index
    %c0_10 = arith.constant 0 : index
    %17 = vector.load %arg4[%c0_8, %c0_9, %c0_10] : memref<1x128x128xf32, #tpu.memory_space<vmem>>, vector<1x128x128xf32>
    %18 = vector.shape_cast %17 : vector<1x128x128xf32> to vector<128x128xf32>
    %cst_11 = arith.constant dense<0.000000e+00> : vector<16x128xf32>
    %19 = tpu.matmul %15, %18, %cst_11 {dimension_numbers = #tpu.dot_dimension_numbers<[1], [0], [0], [1], [0, 0, 1, 1], [], []>} : vector<16x128xf32>, vector<128x128xf32>, vector<16x128xf32> -> vector<16x128xf32>
    %20 = arith.addf %16, %19 : vector<16x128xf32>
    %c0_12 = arith.constant 0 : index
    %c0_13 = arith.constant 0 : index
    %21 = vector.load %arg6[%c0_12, %c0_13] : memref<16x128xf32, #tpu.memory_space<vmem>>, vector<16x128xf32>
    tpu.vector_store %arg6[%c0_12, %c0_13], %20 {strides = array<i32>} : memref<16x128xf32, #tpu.memory_space<vmem>>, vector<16x128xf32>,
    %c2_i32 = arith.constant 2 : i32
    %22 = arith.cmpi eq, %arg1, %c2_i32 : i32
    %23 = arith.extui %22 : i1 to i32
    %c0_i32_14 = arith.constant 0 : i32
    %24 = arith.cmpi ne, %23, %c0_i32_14 : i32
    scf.if %24 {
      %c0_15 = arith.constant 0 : index
      %c0_16 = arith.constant 0 : index
      %25 = vector.load %arg6[%c0_15, %c0_16] : memref<16x128xf32, #tpu.memory_space<vmem>>, vector<16x128xf32>
      %c0_17 = arith.constant 0 : index
      %c0_18 = arith.constant 0 : index
      %26 = vector.load %arg5[%c0_17, %c0_18] : memref<16x128xf32, #tpu.memory_space<vmem>>, vector<16x128xf32>
      tpu.vector_store %arg5[%c0_17, %c0_18], %25 {strides = array<i32>} : memref<16x128xf32, #tpu.memory_space<vmem>>, vector<16x128xf32>,
    } else {
    }
    return
  }
  func.func @transform_0(%arg0: i32, %arg1: i32) -> (i32, i32) {
    %c0_i32 = arith.constant 0 : i32
    %c0_i32_0 = arith.constant 0 : i32
    return %arg0, %c0_i32 : i32, i32
  }
  func.func @transform_1(%arg0: i32, %arg1: i32) -> (i32, i32, i32) {
    %c0_i32 = arith.constant 0 : i32
    %c0_i32_0 = arith.constant 0 : i32
    %c0_i32_1 = arith.constant 0 : i32
    return %arg1, %c0_i32, %c0_i32_0 : i32, i32, i32
  }
  func.func @transform_2(%arg0: i32, %arg1: i32) -> (i32, i32, i32) {
    %c0_i32 = arith.constant 0 : i32
    %c0_i32_0 = arith.constant 0 : i32
    %c0_i32_1 = arith.constant 0 : i32
    return %arg1, %c0_i32, %c0_i32_0 : i32, i32, i32
  }
  func.func @transform_3(%arg0: i32, %arg1: i32) -> (i32, i32) {
    %c0_i32 = arith.constant 0 : i32
    %c0_i32_0 = arith.constant 0 : i32
    return %arg0, %c0_i32 : i32, i32
  }
}

</mosaic_0001>

<llo_original>
// kernel: tpu_custom_call.1
$region0: #{tpu_custom_call.1}
  #allocation0 [shape = 'u32[]', space=smem, size = 0x4, offset = 0x4, fixed_abs, tag = 'smem constant byte address 0x4 - core index']
  #allocation1 [shape = 'u32[72,128]{1,0:T(1,128)}', space=vmem, size = 0x9000, scoped, tag = 'internal scratch']
  #allocation2 [shape = 'f32[16,128]{1,0:T(8,128)}', space=vmem, size = 0x2000, scoped, tag = 'scratch operand']
  %s0 = inlined_call_operand.hbm [shape: f32[16,128], index: 0, kind: input, shape index: {}]
  %s1 = inlined_call_operand.hbm [shape: f32[3,128,256], index: 1, kind: input, shape index: {}]
  %s2 = inlined_call_operand.hbm [shape: f32[3,128,128], index: 2, kind: input, shape index: {}]
  %s3 = inlined_call_operand.hbm [shape: f32[16,128], index: 3, kind: output, shape index: {}]
  %s4 = sld [smem:[#allocation0]]
  $region65: #{tpu_custom_call.1} parent=0
    _
  %s6 = ssub.s32 1, %s4
  %s7 = scalar_select 0, %s6, %s4
  $region1: #{tpu_custom_call.1} parent=0
    #allocation3 [shape = 'u8[8192]{0}', space=vmem, size = 0x2000, scoped, tag = 'input window, operand 0, single buffered']
    #allocation4 [shape = 's32[2]{0}', space=sflag, size = 0x8, scoped, tag = 'scoped memory for tpu_custom_call.1']
    #allocation5 [shape = 's32[2]{0}', space=sflag, size = 0x8, scoped, tag = 'scoped memory for tpu_custom_call.1']
    #allocation6 [shape = 'u8[262144]{0}', space=vmem, size = 0x40000, scoped, tag = 'input window, operand 1']
    #allocation7 [shape = 's32[2]{0}', space=sflag, size = 0x8, scoped, tag = 'scoped memory for tpu_custom_call.1']
    #allocation8 [shape = 'u8[131072]{0}', space=vmem, size = 0x20000, scoped, tag = 'input window, operand 2']
    #allocation9 [shape = 'u8[8192]{0}', space=vmem, size = 0x2000, scoped, tag = 'output window, operand 0, single buffered']
    %8 = vsyncpa [#allocation4], 0
    %9 = vsyncpa [#allocation7], 0
    %s10 = scalar_lea.sflag [#allocation7], 1
    %11 = vsyncpa %s10, 0
    %12 = vsyncpa [#allocation5], 0
    loop: start=0, step=1, limit=5
    $region2: #{tpu_custom_call.1} parent=1 // loop_pre_header
      _
    $region3: #{tpu_custom_call.1} parent=1 // loop_header
      %s14 = sphi 0, %s18
      %p15 = scmp.ge.s32.totalorder %s14, 5
      %s21 = sphi 0, %s33
      %s22 = sphi 0, %s29
      %s23 = sphi 0, %s21
      %s24 = sphi 0, %s22
      %s25 = sphi 0, %s23
      %s26 = sphi 0, %s24
      %s36 = sphi 0, %s38
      %s39 = sphi 0, %s36
      %s40 = sphi 0, %s39
      %s56 = sphi 0, %s40
      %s62 = sphi 0, %s64
      %s65 = sphi 0, %s62
      %s66 = sphi 0, %s65
      %s82 = sphi 0, %s66
      %s88 = sphi 0, %s90
      %s91 = sphi 0, %s88
      %s92 = sphi 0, %s91
      %s108 = sphi 0, %s92
      %s114 = sphi 0, %s116
      %s117 = sphi 0, %s114
      %s118 = sphi 0, %s117
      %s134 = sphi 0, %s118
    $region4: #{tpu_custom_call.1} parent=1 // loop_header_branch
      %17 = sbr.rel (%p15) target = $region8
    $region5: #{tpu_custom_call.1} parent=1 // loop_body
      %s19 = ssub.s32 %s14, 1
      %s20 = ssub.s32 %s14, 2
      %s27 = sadd.s32 1, %s22
      %p28 = scmp.ge.s32.totalorder %s27, 3
      %s29 = scalar_select %p28, 0, %s27
      %s30 = sadd.s32 1, %s21
      %s31 = scalar_select %p28, %s30, %s21
      %p32 = scmp.ge.s32.totalorder %s31, 1
      %s33 = scalar_select %p32, 0, %s31
      %s34 = ssub.s32 %s21, %s33
      %p35 = scmp.eq.s32.totalorder %s34, 0
      %s37 = sadd.s32 %s36, 1
      %s38 = scalar_select %p35, %s36, %s37
      %p41 = pneg %p35
      %p42 = scmp.eq.s32.totalorder %s14, 2
      %p43 = por %p41, %p42
      %p44 = scmp.ne.s32.totalorder %s36, %s39
      %p45 = scmp.eq.s32.totalorder %s14, 0
      %p46 = por %p44, %p45
      %p47 = scmp.ne.s32.totalorder %s36, %s39
      %p48 = scmp.eq.s32.totalorder %s19, 2
      %p49 = por %p47, %p48
      %p50 = scmp.ne.s32.totalorder %s39, %s40
      %p51 = scmp.eq.s32.totalorder %s19, 0
      %p52 = por %p50, %p51
      %p53 = scmp.ne.s32.totalorder %s39, %s40
      %p54 = scmp.eq.s32.totalorder %s20, 2
      %p55 = por %p53, %p54
      %p57 = scmp.ne.s32.totalorder %s40, %s56
      %p58 = scmp.eq.s32.totalorder %s20, 0
      %p59 = por %p57, %p58
      %s60 = ssub.s32 %s22, %s29
      %p61 = scmp.eq.s32.totalorder %s60, 0
      %s63 = sadd.s32 %s62, 1
      %s64 = scalar_select %p61, %s62, %s63
      %p67 = pneg %p61
      %p68 = scmp.eq.s32.totalorder %s14, 2
      %p69 = por %p67, %p68
      %p70 = scmp.ne.s32.totalorder %s62, %s65
      %p71 = scmp.eq.s32.totalorder %s14, 0
      %p72 = por %p70, %p71
      %p73 = scmp.ne.s32.totalorder %s62, %s65
      %p74 = scmp.eq.s32.totalorder %s19, 2
      %p75 = por %p73, %p74
      %p76 = scmp.ne.s32.totalorder %s65, %s66
      %p77 = scmp.eq.s32.totalorder %s19, 0
      %p78 = por %p76, %p77
      %p79 = scmp.ne.s32.totalorder %s65, %s66
      %p80 = scmp.eq.s32.totalorder %s20, 2
      %p81 = por %p79, %p80
      %p83 = scmp.ne.s32.totalorder %s66, %s82
      %p84 = scmp.eq.s32.totalorder %s20, 0
      %p85 = por %p83, %p84
      %s86 = ssub.s32 %s22, %s29
      %p87 = scmp.eq.s32.totalorder %s86, 0
      %s89 = sadd.s32 %s88, 1
      %s90 = scalar_select %p87, %s88, %s89
      %p93 = pneg %p87
      %p94 = scmp.eq.s32.totalorder %s14, 2
      %p95 = por %p93, %p94
      %p96 = scmp.ne.s32.totalorder %s88, %s91
      %p97 = scmp.eq.s32.totalorder %s14, 0
      %p98 = por %p96, %p97
      %p99 = scmp.ne.s32.totalorder %s88, %s91
      %p100 = scmp.eq.s32.totalorder %s19, 2
      %p101 = por %p99, %p100
      %p102 = scmp.ne.s32.totalorder %s91, %s92
      %p103 = scmp.eq.s32.totalorder %s19, 0
      %p104 = por %p102, %p103
      %p105 = scmp.ne.s32.totalorder %s91, %s92
      %p106 = scmp.eq.s32.totalorder %s20, 2
      %p107 = por %p105, %p106
      %p109 = scmp.ne.s32.totalorder %s92, %s108
      %p110 = scmp.eq.s32.totalorder %s20, 0
      %p111 = por %p109, %p110
      %s112 = ssub.s32 %s21, %s33
      %p113 = scmp.eq.s32.totalorder %s112, 0
      %s115 = sadd.s32 %s114, 1
      %s116 = scalar_select %p113, %s114, %s115
      %p119 = pneg %p113
      %p120 = scmp.eq.s32.totalorder %s14, 2
      %p121 = por %p119, %p120
      %p122 = scmp.ne.s32.totalorder %s114, %s117
      %p123 = scmp.eq.s32.totalorder %s14, 0
      %p124 = por %p122, %p123
      %p125 = scmp.ne.s32.totalorder %s114, %s117
      %p126 = scmp.eq.s32.totalorder %s19, 2
      %p127 = por %p125, %p126
      %p128 = scmp.ne.s32.totalorder %s117, %s118
      %p129 = scmp.eq.s32.totalorder %s19, 0
      %p130 = por %p128, %p129
      %p131 = scmp.ne.s32.totalorder %s117, %s118
      %p132 = scmp.eq.s32.totalorder %s20, 2
      %p133 = por %p131, %p132
      %p135 = scmp.ne.s32.totalorder %s118, %s134
      %p136 = scmp.eq.s32.totalorder %s20, 0
      %p137 = por %p135, %p136
      %p138 = scmp.le.s32.totalorder 1, %s14
      %p139 = scmp.lt.s32.totalorder %s14, 4
      %p140 = pnand %p138, %p139
      %p141 = pneg %p140
      // Predicated region
      $region9: #{tpu_custom_call.1} parent=5 // pred_check
        _
      $region10: #{tpu_custom_call.1} parent=5 // pred_check_branch
        %143 = sbr.rel (%p140) target = $region12
      $region11: #{tpu_custom_call.1} parent=5 // pred_region
        %s144 = ssub.s32 %s14, 1
        // Predicated region
        $region13: #{tpu_custom_call.1} parent=11 // pred_check
          %p145 = pneg %p52
        $region14: #{tpu_custom_call.1} parent=11 // pred_check_branch
          %147 = sbr.rel (%p145) target = $region16
        $region15: #{tpu_custom_call.1} parent=11 // pred_region
          %s148 = smul.u32 2, %s23
          %150 = vsyncadd [#allocation4], 0
          %s151 = smul.addr %s148, 8
          %s152 = scalar_lea.hbm %s0, %s151
          %s153 = sshll.u32 %s152, 4
          %s154 = int_to_ptr.hbm [resolvable:$true] %s153
          %s155 = sshll.u32 [#allocation3], 4
          %s156 = int_to_ptr.vmem [resolvable:$true] %s155
          %161 = dma.hbm_to_vmem [thread:$0]  %s154, 256, %s156, [#allocation4], 128, 128, 8
        $region16: #{tpu_custom_call.1} parent=11 // pred_fallthru
          _
      $region12: #{tpu_custom_call.1} parent=5 // pred_fallthru
        _
      %p162 = scmp.lt.s32.totalorder %s14, 3
      // Predicated region
      $region17: #{tpu_custom_call.1} parent=5 // pred_check
        %p163 = pneg %p162
      $region18: #{tpu_custom_call.1} parent=5 // pred_check_branch
        %165 = sbr.rel (%p163) target = $region20
      $region19: #{tpu_custom_call.1} parent=5 // pred_region
        // Predicated region
        $region21: #{tpu_custom_call.1} parent=19 // pred_check
          %p166 = pneg %p72
        $region22: #{tpu_custom_call.1} parent=19 // pred_check_branch
          %168 = sbr.rel (%p166) target = $region24
        $region23: #{tpu_custom_call.1} parent=19 // pred_region
          %s169 = sand.u32 %s14, 1
          %s170 = scalar_lea.sflag [#allocation7], %s169
          %s171 = sand.u32 %s62, 1
          %s172 = smul.addr %s171, 256
          %s173 = scalar_lea.vmem [#allocation6], %s172
          %175 = vsyncadd %s170, 0
          %s176 = smul.addr %s22, 32
          %s177 = smul.addr %s176, 8
          %s178 = scalar_lea.hbm %s1, %s177
          %s179 = sshll.u32 %s178, 4
          %s180 = int_to_ptr.hbm [resolvable:$true] %s179
          %s181 = sshll.u32 %s173, 4
          %s182 = int_to_ptr.vmem [resolvable:$true] %s181
          %187 = dma.hbm_to_vmem [thread:$0]  %s180, 4096, %s182, %s170, 256, 256, 16
        $region24: #{tpu_custom_call.1} parent=19 // pred_fallthru
          _
        // Predicated region
        $region25: #{tpu_custom_call.1} parent=19 // pred_check
          %p188 = pneg %p98
        $region26: #{tpu_custom_call.1} parent=19 // pred_check_branch
          %190 = sbr.rel (%p188) target = $region28
        $region27: #{tpu_custom_call.1} parent=19 // pred_region
          %s191 = sand.u32 %s14, 1
          %s192 = scalar_lea.sflag [#allocation7], %s191
          %s193 = sand.u32 %s88, 1
          %s194 = smul.addr %s193, 128
          %s195 = scalar_lea.vmem [#allocation8], %s194
          %197 = vsyncadd %s192, 0
          %s198 = smul.addr %s22, 16
          %s199 = smul.addr %s198, 8
          %s200 = scalar_lea.hbm %s2, %s199
          %s201 = sshll.u32 %s200, 4
          %s202 = int_to_ptr.hbm [resolvable:$true] %s201
          %s203 = sshll.u32 %s195, 4
          %s204 = int_to_ptr.vmem [resolvable:$true] %s203
          %209 = dma.hbm_to_vmem [thread:$0]  %s202, 2048, %s204, %s192, 128, 128, 8
        $region28: #{tpu_custom_call.1} parent=19 // pred_fallthru
          _
      $region20: #{tpu_custom_call.1} parent=5 // pred_fallthru
        _
      %p210 = scmp.le.s32.totalorder 1, %s14
      %p211 = scmp.lt.s32.totalorder %s14, 4
      %p212 = pnand %p210, %p211
      %p213 = pneg %p212
      // Predicated region
      $region29: #{tpu_custom_call.1} parent=5 // pred_check
        _
      $region30: #{tpu_custom_call.1} parent=5 // pred_check_branch
        %215 = sbr.rel (%p212) target = $region32
      $region31: #{tpu_custom_call.1} parent=5 // pred_region
        %s216 = ssub.s32 %s14, 1
        // Predicated region
        $region33: #{tpu_custom_call.1} parent=31 // pred_check
          %p217 = pneg %p52
        $region34: #{tpu_custom_call.1} parent=31 // pred_check_branch
          %219 = sbr.rel (%p217) target = $region36
        $region35: #{tpu_custom_call.1} parent=31 // pred_region
          %221 = dma.done [#allocation4], 256
        $region36: #{tpu_custom_call.1} parent=31 // pred_fallthru
          _
        %s222 = sand.u32 %s19, 1
        %s223 = scalar_lea.sflag [#allocation7], %s222
        %s224 = sand.u32 %s65, 1
        %s225 = smul.addr %s224, 256
        %s226 = scalar_lea.vmem [#allocation6], %s225
        // Predicated region
        $region37: #{tpu_custom_call.1} parent=31 // pred_check
          %p227 = pneg %p78
        $region38: #{tpu_custom_call.1} parent=31 // pred_check_branch
          %229 = sbr.rel (%p227) target = $region40
        $region39: #{tpu_custom_call.1} parent=31 // pred_region
          %231 = dma.done %s223, 4096
        $region40: #{tpu_custom_call.1} parent=31 // pred_fallthru
          _
        %s232 = sand.u32 %s19, 1
        %s233 = scalar_lea.sflag [#allocation7], %s232
        %s234 = sand.u32 %s91, 1
        %s235 = smul.addr %s234, 128
        %s236 = scalar_lea.vmem [#allocation8], %s235
        // Predicated region
        $region41: #{tpu_custom_call.1} parent=31 // pred_check
          %p237 = pneg %p104
        $region42: #{tpu_custom_call.1} parent=31 // pred_check_branch
          %239 = sbr.rel (%p237) target = $region44
        $region43: #{tpu_custom_call.1} parent=31 // pred_region
          %241 = dma.done %s233, 2048
        $region44: #{tpu_custom_call.1} parent=31 // pred_fallthru
          _
        %p242 = pneg %p52
        %p243 = pneg %p49
        %s244 = sand.u32 %s19, 1
        %s245 = scalar_lea.sflag [#allocation7], %s244
        %s246 = sand.u32 %s65, 1
        %s247 = smul.addr %s246, 256
        %s248 = scalar_lea.vmem [#allocation6], %s247
        %p249 = pneg %p78
        %p250 = pneg %p75
        %s251 = sand.u32 %s19, 1
        %s252 = scalar_lea.sflag [#allocation7], %s251
        %s253 = sand.u32 %s91, 1
        %s254 = smul.addr %s253, 128
        %s255 = scalar_lea.vmem [#allocation8], %s254
        %p256 = pneg %p104
        %p257 = pneg %p101
        %p258 = pneg %p130
        %p259 = pneg %p127
        %s260 = smul.u32 2, %s23
        %s261 = smul.u32 2, %s23
        %p262 = scmp.eq.s32.totalorder %s24, 0
        // Predicated region
        $region45: #{tpu_custom_call.1} parent=31 // pred_check
          %p263 = pneg %p262
        $region46: #{tpu_custom_call.1} parent=31 // pred_check_branch
          %265 = sbr.rel (%p263) target = $region48
        $region47: #{tpu_custom_call.1} parent=31 // pred_region
          %266 = vst [vmem:[#allocation2] sm:$0xff] 0.0
          %267 = vst [vmem:[#allocation2 + $0x8] sm:$0xff] 0.0
        $region48: #{tpu_custom_call.1} parent=31 // pred_fallthru
          _
        %v268 = vld [vmem:[#allocation3] sm:$0xff]
        %v269 = vld [vmem:[#allocation3 + $0x8] sm:$0xff]
        %v270 = vld [vmem:[%s226] sm:$0xff]
        %v271 = vld [vmem:[%s226 + $0x8] sm:$0xff]
        %v272 = vld [vmem:[%s226 + $0x10] sm:$0xff]
        %v273 = vld [vmem:[%s226 + $0x18] sm:$0xff]
        %v274 = vld [vmem:[%s226 + $0x20] sm:$0xff]
        %v275 = vld [vmem:[%s226 + $0x28] sm:$0xff]
        %v276 = vld [vmem:[%s226 + $0x30] sm:$0xff]
        %v277 = vld [vmem:[%s226 + $0x38] sm:$0xff]
        %v278 = vld [vmem:[%s226 + $0x40] sm:$0xff]
        %v279 = vld [vmem:[%s226 + $0x48] sm:$0xff]
        %v280 = vld [vmem:[%s226 + $0x50] sm:$0xff]
        %v281 = vld [vmem:[%s226 + $0x58] sm:$0xff]
        %v282 = vld [vmem:[%s226 + $0x60] sm:$0xff]
        %v283 = vld [vmem:[%s226 + $0x68] sm:$0xff]
        %v284 = vld [vmem:[%s226 + $0x70] sm:$0xff]
        %v285 = vld [vmem:[%s226 + $0x78] sm:$0xff]
        %v286 = vld [vmem:[%s226 + $0x80] sm:$0xff]
        %v287 = vld [vmem:[%s226 + $0x88] sm:$0xff]
        %v288 = vld [vmem:[%s226 + $0x90] sm:$0xff]
        %v289 = vld [vmem:[%s226 + $0x98] sm:$0xff]
        %v290 = vld [vmem:[%s226 + $0xa0] sm:$0xff]
        %v291 = vld [vmem:[%s226 + $0xa8] sm:$0xff]
        %v292 = vld [vmem:[%s226 + $0xb0] sm:$0xff]
        %v293 = vld [vmem:[%s226 + $0xb8] sm:$0xff]
        %v294 = vld [vmem:[%s226 + $0xc0] sm:$0xff]
        %v295 = vld [vmem:[%s226 + $0xc8] sm:$0xff]
        %v296 = vld [vmem:[%s226 + $0xd0] sm:$0xff]
        %v297 = vld [vmem:[%s226 + $0xd8] sm:$0xff]
        %v298 = vld [vmem:[%s226 + $0xe0] sm:$0xff]
        %v299 = vld [vmem:[%s226 + $0xe8] sm:$0xff]
        %v300 = vld [vmem:[%s226 + $0xf0] sm:$0xff]
        %v301 = vld [vmem:[%s226 + $0xf8] sm:$0xff]
        %302 = vmatpush.msra.mxu0 %v300
        %303 = vmatpush.msra.mxu0 %v298
        %304 = vmatpush.msra.mxu0 %v296
        %305 = vmatpush.msra.mxu0 %v294
        %306 = vmatpush.msra.mxu0 %v292
        %307 = vmatpush.msra.mxu0 %v290
        %308 = vmatpush.msra.mxu0 %v288
        %309 = vmatpush.msra.mxu0 %v286
        %310 = vmatpush.msra.mxu0 %v284
        %311 = vmatpush.msra.mxu0 %v282
        %312 = vmatpush.msra.mxu0 %v280
        %313 = vmatpush.msra.mxu0 %v278
        %314 = vmatpush.msra.mxu0 %v276
        %315 = vmatpush.msra.mxu0 %v274
        %316 = vmatpush.msra.mxu0 %v272
        %317 = vmatpush.msra.mxu0 %v270
        %318 = vmatmul.f32.gmra.mxu0 %v268
        %v319 = vpop.f32.mrf.mxu0
        %v320 = vadd.f32 0.0, %v319
        %321 = vmatmul.f32.gmra.mxu0 %v269
        %v322 = vpop.f32.mrf.mxu0
        %v323 = vadd.f32 0.0, %v322
        %324 = vdwg.mxu0
        %325 = vmatpush.msra.mxu0 %v301
        %326 = vmatpush.msra.mxu0 %v299
        %327 = vmatpush.msra.mxu0 %v297
        %328 = vmatpush.msra.mxu0 %v295
        %329 = vmatpush.msra.mxu0 %v293
        %330 = vmatpush.msra.mxu0 %v291
        %331 = vmatpush.msra.mxu0 %v289
        %332 = vmatpush.msra.mxu0 %v287
        %333 = vmatpush.msra.mxu0 %v285
        %334 = vmatpush.msra.mxu0 %v283
        %335 = vmatpush.msra.mxu0 %v281
        %336 = vmatpush.msra.mxu0 %v279
        %337 = vmatpush.msra.mxu0 %v277
        %338 = vmatpush.msra.mxu0 %v275
        %339 = vmatpush.msra.mxu0 %v273
        %340 = vmatpush.msra.mxu0 %v271
        %341 = vmatmul.f32.gmra.mxu0 %v268
        %v342 = vpop.f32.mrf.mxu0
        %v343 = vadd.f32 0.0, %v342
        %344 = vmatmul.f32.gmra.mxu0 %v269
        %v345 = vpop.f32.mrf.mxu0
        %v346 = vadd.f32 0.0, %v345
        %347 = vdwg.mxu0
        %v348 = vxor.u32 %v320, 2147483648
        %v349 = vxor.u32 %v323, 2147483648
        %v350 = vmul.f32 %v348, 1.442695
        %v351 = vpow.pop %v350
        %v352 = vmul.f32 %v349, 1.442695
        %v353 = vpow.pop %v352
        %v354 = vadd.f32 %v351, 1.0
        %v355 = vadd.f32 %v353, 1.0
        %v356 = vrcp.pop %v354
        %v357 = vmul.f32 %v354, %v356
        %v358 = vsub.f32 1.0, %v357
        %v359 = vmul.f32 %v356, %v358
        %v360 = vadd.f32 %v356, %v359
        %vm361 = vweird.f32 %v354
        %vm362 = vweird.f32 %v356
        %vm363 = vmor %vm361, %vm362
        %v364 = vsel %vm363, %v356, %v360
        %v365 = vand.u32 2147483647, %v354
        %vm366 = vcmp.eq.f32.partialorder %v365, 8.507059e+37
        %v367 = vand.u32 %v354, 2147483648
        %v368 = vor.u32 1.1754944e-38, %v367
        %v369 = vsel %vm366, %v368, %v364
        %v370 = vmul.f32 1.0, %v369
        %v371 = vrcp.pop %v355
        %v372 = vmul.f32 %v355, %v371
        %v373 = vsub.f32 1.0, %v372
        %v374 = vmul.f32 %v371, %v373
        %v375 = vadd.f32 %v371, %v374
        %vm376 = vweird.f32 %v355
        %vm377 = vweird.f32 %v371
        %vm378 = vmor %vm376, %vm377
        %v379 = vsel %vm378, %v371, %v375
        %v380 = vand.u32 2147483647, %v355
        %vm381 = vcmp.eq.f32.partialorder %v380, 8.507059e+37
        %v382 = vand.u32 %v355, 2147483648
        %v383 = vor.u32 1.1754944e-38, %v382
        %v384 = vsel %vm381, %v383, %v379
        %v385 = vmul.f32 1.0, %v384
        %v386 = vmul.f32 %v320, %v370
        %v387 = vmul.f32 %v323, %v385
        %v388 = vmul.f32 %v386, %v343
        %v389 = vmul.f32 %v387, %v346
        %v390 = vld [vmem:[#allocation2] sm:$0xff]
        %v391 = vld [vmem:[#allocation2 + $0x8] sm:$0xff]
        %v392 = vld [vmem:[%s236] sm:$0xff]
        %v393 = vld [vmem:[%s236 + $0x8] sm:$0xff]
        %v394 = vld [vmem:[%s236 + $0x10] sm:$0xff]
        %v395 = vld [vmem:[%s236 + $0x18] sm:$0xff]
        %v396 = vld [vmem:[%s236 + $0x20] sm:$0xff]
        %v397 = vld [vmem:[%s236 + $0x28] sm:$0xff]
        %v398 = vld [vmem:[%s236 + $0x30] sm:$0xff]
        %v399 = vld [vmem:[%s236 + $0x38] sm:$0xff]
        %v400 = vld [vmem:[%s236 + $0x40] sm:$0xff]
        %v401 = vld [vmem:[%s236 + $0x48] sm:$0xff]
        %v402 = vld [vmem:[%s236 + $0x50] sm:$0xff]
        %v403 = vld [vmem:[%s236 + $0x58] sm:$0xff]
        %v404 = vld [vmem:[%s236 + $0x60] sm:$0xff]
        %v405 = vld [vmem:[%s236 + $0x68] sm:$0xff]
        %v406 = vld [vmem:[%s236 + $0x70] sm:$0xff]
        %v407 = vld [vmem:[%s236 + $0x78] sm:$0xff]
        %408 = vmatpush.msra.mxu0 %v407
        %409 = vmatpush.msra.mxu0 %v406
        %410 = vmatpush.msra.mxu0 %v405
        %411 = vmatpush.msra.mxu0 %v404
        %412 = vmatpush.msra.mxu0 %v403
        %413 = vmatpush.msra.mxu0 %v402
        %414 = vmatpush.msra.mxu0 %v401
        %415 = vmatpush.msra.mxu0 %v400
        %416 = vmatpush.msra.mxu0 %v399
        %417 = vmatpush.msra.mxu0 %v398
        %418 = vmatpush.msra.mxu0 %v397
        %419 = vmatpush.msra.mxu0 %v396
        %420 = vmatpush.msra.mxu0 %v395
        %421 = vmatpush.msra.mxu0 %v394
        %422 = vmatpush.msra.mxu0 %v393
        %423 = vmatpush.msra.mxu0 %v392
        %424 = vmatmul.f32.gmra.mxu0 %v388
        %v425 = vpop.f32.mrf.mxu0
        %v426 = vadd.f32 0.0, %v425
        %427 = vmatmul.f32.gmra.mxu0 %v389
        %v428 = vpop.f32.mrf.mxu0
        %v429 = vadd.f32 0.0, %v428
        %430 = vdwg.mxu0
        %v431 = vadd.f32 %v390, %v426
        %v432 = vadd.f32 %v391, %v429
        %433 = vst [vmem:[#allocation2] sm:$0xff] %v431
        %434 = vst [vmem:[#allocation2 + $0x8] sm:$0xff] %v432
        %p435 = scmp.eq.s32.totalorder %s24, 2
        // Predicated region
        $region49: #{tpu_custom_call.1} parent=31 // pred_check
          %p436 = pneg %p435
        $region50: #{tpu_custom_call.1} parent=31 // pred_check_branch
          %438 = sbr.rel (%p436) target = $region52
        $region51: #{tpu_custom_call.1} parent=31 // pred_region
          %v439 = vld [vmem:[#allocation2] sm:$0xff]
          %v440 = vld [vmem:[#allocation2 + $0x8] sm:$0xff]
          %441 = vst [vmem:[#allocation9] sm:$0xff] %v439
          %442 = vst [vmem:[#allocation9 + $0x8] sm:$0xff] %v440
        $region52: #{tpu_custom_call.1} parent=31 // pred_fallthru
          _
        // Predicated region
        $region53: #{tpu_custom_call.1} parent=31 // pred_check
          %p443 = pneg %p127
        $region54: #{tpu_custom_call.1} parent=31 // pred_check_branch
          %445 = sbr.rel (%p443) target = $region56
        $region55: #{tpu_custom_call.1} parent=31 // pred_region
          %s446 = smul.u32 2, %s23
          %448 = vsyncadd [#allocation5], 0
          %s449 = smul.addr %s446, 8
          %s450 = scalar_lea.hbm %s3, %s449
          %s451 = sshll.u32 [#allocation9], 4
          %s452 = int_to_ptr.vmem [resolvable:$true] %s451
          %s453 = sshll.u32 %s450, 4
          %s454 = int_to_ptr.hbm [resolvable:$true] %s453
          %459 = dma.vmem_to_hbm [thread:$0]  %s452, 256, %s454, [#allocation5], 128, 128, 8
        $region56: #{tpu_custom_call.1} parent=31 // pred_fallthru
          _
        // Predicated region
        $region57: #{tpu_custom_call.1} parent=31 // pred_check
          %p460 = pneg %p127
        $region58: #{tpu_custom_call.1} parent=31 // pred_check_branch
          %462 = sbr.rel (%p460) target = $region60
        $region59: #{tpu_custom_call.1} parent=31 // pred_region
          %464 = dma.done [#allocation5], 256
        $region60: #{tpu_custom_call.1} parent=31 // pred_fallthru
          _
      $region32: #{tpu_custom_call.1} parent=5 // pred_fallthru
        _
      %p465 = scmp.le.s32.totalorder 2, %s14
      // Predicated region
      $region61: #{tpu_custom_call.1} parent=5 // pred_check
        %p466 = pneg %p465
      $region62: #{tpu_custom_call.1} parent=5 // pred_check_branch
        %468 = sbr.rel (%p466) target = $region64
      $region63: #{tpu_custom_call.1} parent=5 // pred_region
        %s469 = ssub.s32 %s14, 2
      $region64: #{tpu_custom_call.1} parent=5 // pred_fallthru
        _
    $region6: #{tpu_custom_call.1} parent=1 // loop_footer
      %s18 = sadd.s32 1, %s14
    $region7: #{tpu_custom_call.1} parent=1 // loop_footer_branch
      %13 = sbr.rel target = $region3
    $region8: #{tpu_custom_call.1} parent=1 // loop_exit
      _
    %470 = vsyncpa [#allocation4], 1
    %s471 = scalar_lea.sflag [#allocation4], 1
    %472 = vsyncpa %s471, 1
    %473 = vsyncpa [#allocation7], 1
    %s474 = scalar_lea.sflag [#allocation7], 1
    %475 = vsyncpa %s474, 1
    %476 = vsyncpa [#allocation5], 1
    %s477 = scalar_lea.sflag [#allocation5], 1
    %478 = vsyncpa %s477, 1

</llo_original>
